<compile_context>
chip_gen: v7x
topology: tpu7x:2x2x1
jax: 0.10.0
libtpu: 0.0.40
codegen_flags: <defaults>
</compile_context>

<pallas_src>
import jax
import jax.numpy as jnp
from jax.experimental import pallas as pl
from jax.experimental.pallas import tpu as pltpu


def _round_up(x, m):
    return (x + m - 1) // m * m


def critic_kernel(x_ref, w1_ref, b1_ref, w2_ref, b2_ref, w3r_ref, b3_ref, o_ref):
    # Hidden layer 1 (MXU): relu(x @ W1 + b1), f32 accumulation, f32 epilogue.
    x = x_ref[...].astype(w1_ref.dtype)
    h1 = jnp.dot(x, w1_ref[...], preferred_element_type=jnp.float32) + b1_ref[...]
    h1 = jnp.maximum(h1, 0.0)
    # Hidden layer 2 (MXU): relu(h1 @ W2 + b2).
    h2 = jnp.dot(h1.astype(w2_ref.dtype), w2_ref[...],
                 preferred_element_type=jnp.float32) + b2_ref[...]
    h2 = jnp.maximum(h2, 0.0)
    # Value head (N=1): keep it off the MXU -- VPU broadcast-multiply + lane reduce.
    v = jnp.sum(h2 * w3r_ref[...], axis=-1, keepdims=True) + b3_ref[0, 0]
    o_ref[...] = v.astype(o_ref.dtype)


def _vmem_limit_bytes(tile_b, S, H, w_itemsize, n_weight_buffers):
    """Scoped-VMEM budget from the actual resident footprint (+ headroom)."""
    lane = 128
    pad = lambda n: _round_up(n, lane)
    weights = (S * pad(H) + H * pad(H)) * w_itemsize * n_weight_buffers   # W1, W2
    vectors = 3 * 8 * pad(H) * 4 * n_weight_buffers                        # b1, b2, w3_row
    state = 2 * tile_b * pad(S) * 4                                        # double-buffered input tile
    out = 2 * tile_b * pad(1) * 4                                          # double-buffered output tile
    inter = 3 * tile_b * pad(H) * 4                                        # x-cast / h1 / h2 live values
    est = int(1.3 * (weights + vectors + state + out + inter)) + (2 << 20)
    # Floor keeps small/toy shapes comfortable; ceiling stays within v7x physical VMEM.
    return max(16 << 20, min(est, 64 << 20))


def _build_specs(tile_b, S, H, single_buffer_weights):
    # Constant-index (resident) operands: single buffer to avoid 2x VMEM waste.
    resident = {"pipeline_mode": pl.Buffered(1)} if single_buffer_weights else {}
    in_specs = [
        pl.BlockSpec((tile_b, S), lambda i: (i, 0)),            # state tile (pipelined)
        pl.BlockSpec((S, H), lambda i: (0, 0), **resident),     # W1 (resident)
        pl.BlockSpec((1, H), lambda i: (0, 0), **resident),     # b1
        pl.BlockSpec((H, H), lambda i: (0, 0), **resident),     # W2
        pl.BlockSpec((1, H), lambda i: (0, 0), **resident),     # b2
        pl.BlockSpec((1, H), lambda i: (0, 0), **resident),     # W3 as a lane row
        pl.BlockSpec(memory_space=pltpu.MemorySpace.SMEM),      # b3 scalar in SMEM
    ]
    out_specs = pl.BlockSpec((tile_b, 1), lambda i: (i, 0))
    return in_specs, out_specs


def _critic_pallas(state, w1, b1, w2, b2, w3_row, b3, *, tile_b, single_buffer_weights):
    B, S = state.shape
    H = w1.shape[1]
    in_specs, out_specs = _build_specs(tile_b, S, H, single_buffer_weights)
    n_wbuf = 1 if single_buffer_weights else 2
    return pl.pallas_call(
        critic_kernel,
        out_shape=jax.ShapeDtypeStruct((B, 1), jnp.float32),
        grid_spec=pltpu.PrefetchScalarGridSpec(
            num_scalar_prefetch=0,
            grid=(B // tile_b,),
            in_specs=in_specs,
            out_specs=out_specs,
        ),
        compiler_params=pltpu.CompilerParams(
            dimension_semantics=("parallel",),   # batch tiles independent -> v7x megacore
            vmem_limit_bytes=_vmem_limit_bytes(tile_b, S, H, w1.dtype.itemsize, n_wbuf),
        ),
    )(state, w1, b1, w2, b2, w3_row, b3)


def critic_forward(state, params, *, tile_b=256, weight_dtype=None):
    """Critic forward pass: relu(x@W1+b1) -> relu(.@W2+b2) -> .@W3+b3 -> [B, 1].

    state: [B, state_dim] float32
    params: dict with w1 [S,H], b1 [1,H], w2 [H,H], b2 [1,H], w3 [H,1], b3 [1,1]
    weight_dtype: optional (e.g. jnp.bfloat16) storage dtype for W1/W2; accumulation
                  and the epilogue stay in float32.
    """
    B, S = state.shape
    H = params["w1"].shape[1]

    # Row tile: multiple of 8 (f32 sublane packing), bounded by the (padded) batch so
    # realistic batches get a multi-step, pipelined grid.
    tile_b = max(8, min(int(tile_b), _round_up(B, 8)))
    tile_b = _round_up(tile_b, 8)
    B_pad = _round_up(B, tile_b)
    x = state if B_pad == B else jnp.pad(state, ((0, B_pad - B), (0, 0)))

    w1, w2 = params["w1"], params["w2"]
    if weight_dtype is not None:
        w1 = w1.astype(weight_dtype)
        w2 = w2.astype(weight_dtype)
    b1 = params["b1"].astype(jnp.float32)
    b2 = params["b2"].astype(jnp.float32)
    w3_row = params["w3"].reshape(1, H).astype(jnp.float32)   # value head as lane vector
    b3 = params["b3"].reshape(1, 1).astype(jnp.float32)

    last_err = None
    for single_buffer_weights in (True, False):
        try:
            out = _critic_pallas(x, w1, b1, w2, b2, w3_row, b3,
                                 tile_b=tile_b,
                                 single_buffer_weights=single_buffer_weights)
            out = jax.block_until_ready(out)
            return out[:B]
        except Exception as e:  # fall back to default (double) buffering if Buffered(1)
            last_err = e        # is not supported by the installed Pallas version.
    raise last_err


def init_critic_params(key, state_dim, net_width):
    """Deterministic synthetic init matching nn.Linear shapes.

    PyTorch nn.Linear(in, out) has weight [out, in]; we store the transpose [in, out]
    and keep the uniform(-1/sqrt(in), 1/sqrt(in)) init scheme.
    """
    ks = jax.random.split(key, 6)

    def linear(kw, kb, fan_in, fan_out):
        bound = 1.0 / jnp.sqrt(jnp.float32(fan_in))
        w = jax.random.uniform(kw, (fan_in, fan_out), jnp.float32, -bound, bound)
        b = jax.random.uniform(kb, (1, fan_out), jnp.float32, -bound, bound)
        return w, b

    w1, b1 = linear(ks[0], ks[1], state_dim, net_width)
    w2, b2 = linear(ks[2], ks[3], net_width, net_width)
    w3, b3 = linear(ks[4], ks[5], net_width, 1)
    return {"w1": w1, "b1": b1, "w2": w2, "b2": b2, "w3": w3, "b3": b3}


def critic_ref(state, p):
    """Pure-JAX reference of the PyTorch forward."""
    v = jnp.maximum(state @ p["w1"] + p["b1"], 0.0)
    v = jnp.maximum(v @ p["w2"] + p["b2"], 0.0)
    return v @ p["w3"] + p["b3"]


if __name__ == "__main__":
    key = jax.random.PRNGKey(0)
    k_params, k_state, k_state2 = jax.random.split(key, 3)

    batch = 8
    state_dim = 16
    net_width = 32

    params = init_critic_params(k_params, state_dim, net_width)
    state = jax.random.normal(k_state, (batch, state_dim), jnp.float32)
    ref = critic_ref(state, params)

    # f32 path.
    out = jax.block_until_ready(critic_forward(state, params))
    assert out.shape == (batch, 1)
    assert jnp.allclose(out, ref, atol=1e-5, rtol=1e-5)

    # bf16-weight fast path (v6e/v7x MXU), f32 accumulation -> looser tolerance.
    out_bf16 = jax.block_until_ready(
        critic_forward(state, params, weight_dtype=jnp.bfloat16))
    assert jnp.allclose(out_bf16, ref, atol=1e-1, rtol=1e-1)

    # Multi-tile grid path: non-multiple batch gets padded, several pipelined tiles.
    state2 = jax.random.normal(k_state2, (40, state_dim), jnp.float32)
    out2 = jax.block_until_ready(critic_forward(state2, params, tile_b=16))
    assert out2.shape == (40, 1)
    assert jnp.allclose(out2, critic_ref(state2, params), atol=1e-5, rtol=1e-5)

    print("KERNEL_OK")
</pallas_src>

<mosaic_0001>
module attributes {stable_mosaic.version = 11 : i64} {
  func.func @critic_kernel(%arg0: i32, %arg1: memref<8x16xf32, #tpu.memory_space<vmem>>, %arg2: memref<16x32xf32, #tpu.memory_space<vmem>>, %arg3: memref<1x32xf32, #tpu.memory_space<vmem>>, %arg4: memref<32x32xf32, #tpu.memory_space<vmem>>, %arg5: memref<1x32xf32, #tpu.memory_space<vmem>>, %arg6: memref<1x32xf32, #tpu.memory_space<vmem>>, %arg7: memref<1x1xf32, #tpu.memory_space<smem>>, %arg8: memref<8x1xf32, #tpu.memory_space<vmem>>) attributes {dimension_semantics = [#tpu.dimension_semantics<parallel>], iteration_bounds = array<i64: 1>, scalar_prefetch = 0 : i64, scratch_operands = 0 : i64, tpu.core_type = #tpu.core_type<tc>, window_params = [{transform_indices = @transform_0, window_bounds = array<i64: 8, 16>}, {pipeline_mode = #tpu.pipeline_mode<synchronous>, transform_indices = @transform_1, window_bounds = array<i64: 16, 32>}, {pipeline_mode = #tpu.pipeline_mode<synchronous>, transform_indices = @transform_2, window_bounds = array<i64: 1, 32>}, {pipeline_mode = #tpu.pipeline_mode<synchronous>, transform_indices = @transform_3, window_bounds = array<i64: 32, 32>}, {pipeline_mode = #tpu.pipeline_mode<synchronous>, transform_indices = @transform_4, window_bounds = array<i64: 1, 32>}, {pipeline_mode = #tpu.pipeline_mode<synchronous>, transform_indices = @transform_5, window_bounds = array<i64: 1, 32>}, {transform_indices = @transform_6, window_bounds = array<i64: 1, 1>}, {transform_indices = @transform_7, window_bounds = array<i64: 8, 1>}]} {
    %c0 = arith.constant 0 : index
    %c0_0 = arith.constant 0 : index
    %0 = vector.load %arg1[%c0, %c0_0] : memref<8x16xf32, #tpu.memory_space<vmem>>, vector<8x16xf32>
    %c0_1 = arith.constant 0 : index
    %c0_2 = arith.constant 0 : index
    %1 = vector.load %arg2[%c0_1, %c0_2] : memref<16x32xf32, #tpu.memory_space<vmem>>, vector<16x32xf32>
    %cst = arith.constant dense<0.000000e+00> : vector<8x32xf32>
    %2 = tpu.matmul %0, %1, %cst {dimension_numbers = #tpu.dot_dimension_numbers<[1], [0], [0], [1], [0, 0, 1, 1], [], []>} : vector<8x16xf32>, vector<16x32xf32>, vector<8x32xf32> -> vector<8x32xf32>
    %c0_3 = arith.constant 0 : index
    %c0_4 = arith.constant 0 : index
    %3 = vector.load %arg3[%c0_3, %c0_4] : memref<1x32xf32, #tpu.memory_space<vmem>>, vector<1x32xf32>
    %4 = vector.broadcast %3 : vector<1x32xf32> to vector<8x32xf32>
    %5 = arith.addf %2, %4 : vector<8x32xf32>
    %cst_5 = arith.constant 0.000000e+00 : f32
    %6 = vector.broadcast %cst_5 : f32 to vector<8x32xf32>
    %7 = arith.maximumf %5, %6 : vector<8x32xf32>
    %c0_6 = arith.constant 0 : index
    %c0_7 = arith.constant 0 : index
    %8 = vector.load %arg4[%c0_6, %c0_7] : memref<32x32xf32, #tpu.memory_space<vmem>>, vector<32x32xf32>
    %cst_8 = arith.constant dense<0.000000e+00> : vector<8x32xf32>
    %9 = tpu.matmul %7, %8, %cst_8 {dimension_numbers = #tpu.dot_dimension_numbers<[1], [0], [0], [1], [0, 0, 1, 1], [], []>} : vector<8x32xf32>, vector<32x32xf32>, vector<8x32xf32> -> vector<8x32xf32>
    %c0_9 = arith.constant 0 : index
    %c0_10 = arith.constant 0 : index
    %10 = vector.load %arg5[%c0_9, %c0_10] : memref<1x32xf32, #tpu.memory_space<vmem>>, vector<1x32xf32>
    %11 = vector.broadcast %10 : vector<1x32xf32> to vector<8x32xf32>
    %12 = arith.addf %9, %11 : vector<8x32xf32>
    %cst_11 = arith.constant 0.000000e+00 : f32
    %13 = vector.broadcast %cst_11 : f32 to vector<8x32xf32>
    %14 = arith.maximumf %12, %13 : vector<8x32xf32>
    %c0_12 = arith.constant 0 : index
    %c0_13 = arith.constant 0 : index
    %15 = vector.load %arg6[%c0_12, %c0_13] : memref<1x32xf32, #tpu.memory_space<vmem>>, vector<1x32xf32>
    %16 = vector.broadcast %15 : vector<1x32xf32> to vector<8x32xf32>
    %17 = arith.mulf %14, %16 : vector<8x32xf32>
    %cst_14 = arith.constant dense<0.000000e+00> : vector<8xf32>
    %18 = vector.multi_reduction <add>, %17, %cst_14 [1] : vector<8x32xf32> to vector<8xf32>
    %19 = vector.shape_cast %18 : vector<8xf32> to vector<8x1xf32>
    %c0_15 = arith.constant 0 : index
    %c0_16 = arith.constant 0 : index
    %20 = memref.load %arg7[%c0_15, %c0_16] : memref<1x1xf32, #tpu.memory_space<smem>>
    %21 = vector.broadcast %20 : f32 to vector<8x1xf32>
    %22 = arith.addf %19, %21 : vector<8x1xf32>
    %c0_17 = arith.constant 0 : index
    %c0_18 = arith.constant 0 : index
    %23 = vector.load %arg8[%c0_17, %c0_18] : memref<8x1xf32, #tpu.memory_space<vmem>>, vector<8x1xf32>
    tpu.vector_store %arg8[%c0_17, %c0_18], %22 {strides = array<i32>} : memref<8x1xf32, #tpu.memory_space<vmem>>, vector<8x1xf32>,
    return
  }
  func.func @transform_0(%arg0: i32) -> (i32, i32) {
    %c0_i32 = arith.constant 0 : i32
    %c0_i32_0 = arith.constant 0 : i32
    return %arg0, %c0_i32 : i32, i32
  }
  func.func @transform_1(%arg0: i32) -> (i32, i32) {
    %c0_i32 = arith.constant 0 : i32
    %c0_i32_0 = arith.constant 0 : i32
    %c0_i32_1 = arith.constant 0 : i32
    return %c0_i32, %c0_i32_0 : i32, i32
  }
  func.func @transform_2(%arg0: i32) -> (i32, i32) {
    %c0_i32 = arith.constant 0 : i32
    %c0_i32_0 = arith.constant 0 : i32
    %c0_i32_1 = arith.constant 0 : i32
    return %c0_i32, %c0_i32_0 : i32, i32
  }
  func.func @transform_3(%arg0: i32) -> (i32, i32) {
    %c0_i32 = arith.constant 0 : i32
    %c0_i32_0 = arith.constant 0 : i32
    %c0_i32_1 = arith.constant 0 : i32
    return %c0_i32, %c0_i32_0 : i32, i32
  }
  func.func @transform_4(%arg0: i32) -> (i32, i32) {
    %c0_i32 = arith.constant 0 : i32
    %c0_i32_0 = arith.constant 0 : i32
    %c0_i32_1 = arith.constant 0 : i32
    return %c0_i32, %c0_i32_0 : i32, i32
  }
  func.func @transform_5(%arg0: i32) -> (i32, i32) {
    %c0_i32 = arith.constant 0 : i32
    %c0_i32_0 = arith.constant 0 : i32
    %c0_i32_1 = arith.constant 0 : i32
    return %c0_i32, %c0_i32_0 : i32, i32
  }
  func.func @transform_6(%arg0: i32) -> (i32, i32) {
    %c0_i32 = arith.constant 0 : i32
    %c0_i32_0 = arith.constant 0 : i32
    %c0_i32_1 = arith.constant 0 : i32
    return %c0_i32, %c0_i32_0 : i32, i32
  }
  func.func @transform_7(%arg0: i32) -> (i32, i32) {
    %c0_i32 = arith.constant 0 : i32
    %c0_i32_0 = arith.constant 0 : i32
    return %arg0, %c0_i32 : i32, i32
  }
}

module attributes {stable_mosaic.version = 11 : i64} {
  func.func @critic_kernel(%arg0: i32, %arg1: memref<8x16xf32, #tpu.memory_space<vmem>>, %arg2: memref<16x32xf32, #tpu.memory_space<vmem>>, %arg3: memref<1x32xf32, #tpu.memory_space<vmem>>, %arg4: memref<32x32xf32, #tpu.memory_space<vmem>>, %arg5: memref<1x32xf32, #tpu.memory_space<vmem>>, %arg6: memref<1x32xf32, #tpu.memory_space<vmem>>, %arg7: memref<1x1xf32, #tpu.memory_space<smem>>, %arg8: memref<8x1xf32, #tpu.memory_space<vmem>>) attributes {dimension_semantics = [#tpu.dimension_semantics<parallel>], iteration_bounds = array<i64: 1>, scalar_prefetch = 0 : i64, scratch_operands = 0 : i64, tpu.core_type = #tpu.core_type<tc>, window_params = [{transform_indices = @transform_0, window_bounds = array<i64: 8, 16>}, {pipeline_mode = #tpu.pipeline_mode<synchronous>, transform_indices = @transform_1, window_bounds = array<i64: 16, 32>}, {pipeline_mode = #tpu.pipeline_mode<synchronous>, transform_indices = @transform_2, window_bounds = array<i64: 1, 32>}, {pipeline_mode = #tpu.pipeline_mode<synchronous>, transform_indices = @transform_3, window_bounds = array<i64: 32, 32>}, {pipeline_mode = #tpu.pipeline_mode<synchronous>, transform_indices = @transform_4, window_bounds = array<i64: 1, 32>}, {pipeline_mode = #tpu.pipeline_mode<synchronous>, transform_indices = @transform_5, window_bounds = array<i64: 1, 32>}, {transform_indices = @transform_6, window_bounds = array<i64: 1, 1>}, {transform_indices = @transform_7, window_bounds = array<i64: 8, 1>}]} {
    %c0 = arith.constant 0 : index
    %c0_0 = arith.constant 0 : index
    %0 = vector.load %arg1[%c0, %c0_0] : memref<8x16xf32, #tpu.memory_space<vmem>>, vector<8x16xf32>
    %c0_1 = arith.constant 0 : index
    %c0_2 = arith.constant 0 : index
    %1 = vector.load %arg2[%c0_1, %c0_2] : memref<16x32xf32, #tpu.memory_space<vmem>>, vector<16x32xf32>
    %cst = arith.constant dense<0.000000e+00> : vector<8x32xf32>
    %2 = tpu.matmul %0, %1, %cst {dimension_numbers = #tpu.dot_dimension_numbers<[1], [0], [0], [1], [0, 0, 1, 1], [], []>} : vector<8x16xf32>, vector<16x32xf32>, vector<8x32xf32> -> vector<8x32xf32>
    %c0_3 = arith.constant 0 : index
    %c0_4 = arith.constant 0 : index
    %3 = vector.load %arg3[%c0_3, %c0_4] : memref<1x32xf32, #tpu.memory_space<vmem>>, vector<1x32xf32>
    %4 = vector.broadcast %3 : vector<1x32xf32> to vector<8x32xf32>
    %5 = arith.addf %2, %4 : vector<8x32xf32>
    %cst_5 = arith.constant 0.000000e+00 : f32
    %6 = vector.broadcast %cst_5 : f32 to vector<8x32xf32>
    %7 = arith.maximumf %5, %6 : vector<8x32xf32>
    %c0_6 = arith.constant 0 : index
    %c0_7 = arith.constant 0 : index
    %8 = vector.load %arg4[%c0_6, %c0_7] : memref<32x32xf32, #tpu.memory_space<vmem>>, vector<32x32xf32>
    %cst_8 = arith.constant dense<0.000000e+00> : vector<8x32xf32>
    %9 = tpu.matmul %7, %8, %cst_8 {dimension_numbers = #tpu.dot_dimension_numbers<[1], [0], [0], [1], [0, 0, 1, 1], [], []>} : vector<8x32xf32>, vector<32x32xf32>, vector<8x32xf32> -> vector<8x32xf32>
    %c0_9 = arith.constant 0 : index
    %c0_10 = arith.constant 0 : index
    %10 = vector.load %arg5[%c0_9, %c0_10] : memref<1x32xf32, #tpu.memory_space<vmem>>, vector<1x32xf32>
    %11 = vector.broadcast %10 : vector<1x32xf32> to vector<8x32xf32>
    %12 = arith.addf %9, %11 : vector<8x32xf32>
    %cst_11 = arith.constant 0.000000e+00 : f32
    %13 = vector.broadcast %cst_11 : f32 to vector<8x32xf32>
    %14 = arith.maximumf %12, %13 : vector<8x32xf32>
    %c0_12 = arith.constant 0 : index
    %c0_13 = arith.constant 0 : index
    %15 = vector.load %arg6[%c0_12, %c0_13] : memref<1x32xf32, #tpu.memory_space<vmem>>, vector<1x32xf32>
    %16 = vector.broadcast %15 : vector<1x32xf32> to vector<8x32xf32>
    %17 = arith.mulf %14, %16 : vector<8x32xf32>
    %cst_14 = arith.constant dense<0.000000e+00> : vector<8xf32>
    %18 = vector.multi_reduction <add>, %17, %cst_14 [1] : vector<8x32xf32> to vector<8xf32>
    %19 = vector.shape_cast %18 : vector<8xf32> to vector<8x1xf32>
    %c0_15 = arith.constant 0 : index
    %c0_16 = arith.constant 0 : index
    %20 = memref.load %arg7[%c0_15, %c0_16] : memref<1x1xf32, #tpu.memory_space<smem>>
    %21 = vector.broadcast %20 : f32 to vector<8x1xf32>
    %22 = arith.addf %19, %21 : vector<8x1xf32>
    %c0_17 = arith.constant 0 : index
    %c0_18 = arith.constant 0 : index
    %23 = vector.load %arg8[%c0_17, %c0_18] : memref<8x1xf32, #tpu.memory_space<vmem>>, vector<8x1xf32>
    tpu.vector_store %arg8[%c0_17, %c0_18], %22 {strides = array<i32>} : memref<8x1xf32, #tpu.memory_space<vmem>>, vector<8x1xf32>,
    return
  }
  func.func @transform_0(%arg0: i32) -> (i32, i32) {
    %c0_i32 = arith.constant 0 : i32
    %c0_i32_0 = arith.constant 0 : i32
    return %arg0, %c0_i32 : i32, i32
  }
  func.func @transform_1(%arg0: i32) -> (i32, i32) {
    %c0_i32 = arith.constant 0 : i32
    %c0_i32_0 = arith.constant 0 : i32
    %c0_i32_1 = arith.constant 0 : i32
    return %c0_i32, %c0_i32_0 : i32, i32
  }
  func.func @transform_2(%arg0: i32) -> (i32, i32) {
    %c0_i32 = arith.constant 0 : i32
    %c0_i32_0 = arith.constant 0 : i32
    %c0_i32_1 = arith.constant 0 : i32
    return %c0_i32, %c0_i32_0 : i32, i32
  }
  func.func @transform_3(%arg0: i32) -> (i32, i32) {
    %c0_i32 = arith.constant 0 : i32
    %c0_i32_0 = arith.constant 0 : i32
    %c0_i32_1 = arith.constant 0 : i32
    return %c0_i32, %c0_i32_0 : i32, i32
  }
  func.func @transform_4(%arg0: i32) -> (i32, i32) {
    %c0_i32 = arith.constant 0 : i32
    %c0_i32_0 = arith.constant 0 : i32
    %c0_i32_1 = arith.constant 0 : i32
    return %c0_i32, %c0_i32_0 : i32, i32
  }
  func.func @transform_5(%arg0: i32) -> (i32, i32) {
    %c0_i32 = arith.constant 0 : i32
    %c0_i32_0 = arith.constant 0 : i32
    %c0_i32_1 = arith.constant 0 : i32
    return %c0_i32, %c0_i32_0 : i32, i32
  }
  func.func @transform_6(%arg0: i32) -> (i32, i32) {
    %c0_i32 = arith.constant 0 : i32
    %c0_i32_0 = arith.constant 0 : i32
    %c0_i32_1 = arith.constant 0 : i32
    return %c0_i32, %c0_i32_0 : i32, i32
  }
  func.func @transform_7(%arg0: i32) -> (i32, i32) {
    %c0_i32 = arith.constant 0 : i32
    %c0_i32_0 = arith.constant 0 : i32
    return %arg0, %c0_i32 : i32, i32
  }
}

</mosaic_0001>

<llo_original>
// kernel: tpu_custom_call.1
$region0: #{tpu_custom_call.1}
  #allocation0 [shape = 'u32[]', space=smem, size = 0x4, offset = 0x4, fixed_abs, tag = 'smem constant byte address 0x4 - core index']
  #allocation1 [shape = 'u32[144,128]{1,0:T(1,128)}', space=vmem, size = 0x12000, scoped, tag = 'internal scratch']
  #allocation2 [shape = 'f32[1,1]{1,0:T(1,128)S(6)}', space=smem, size = 0x200, scoped, tag = 'scoped memory for tpu_custom_call.1']
  %s0 = inlined_call_operand.hbm [shape: f32[8,16], index: 0, kind: input, shape index: {}]
  %s1 = inlined_call_operand.hbm [shape: f32[16,32], index: 1, kind: input, shape index: {}]
  %s2 = inlined_call_operand.vmem [shape: f32[1,32], index: 2, kind: input, shape index: {}]
  %s3 = inlined_call_operand.hbm [shape: f32[32,32], index: 3, kind: input, shape index: {}]
  %s4 = inlined_call_operand.vmem [shape: f32[1,32], index: 4, kind: input, shape index: {}]
  %s5 = inlined_call_operand.vmem [shape: f32[1,32], index: 5, kind: input, shape index: {}]
  %s6 = inlined_call_operand.<no memory space> [shape: f32[1,1], index: 6, kind: input, shape index: {}]
  %s7 = inlined_call_operand.vmem [shape: f32[8,1], index: 7, kind: output, shape index: {}]
  %s8 = sld [smem:[#allocation0]]
  $region50: #{tpu_custom_call.1} parent=0
    _
  %s10 = ssub.s32 1, %s8
  %s11 = scalar_select 0, %s10, %s8
  %12 = sst [smem:[#allocation2]] %s6
  $region1: #{tpu_custom_call.1} parent=0
    #allocation3 [shape = 'u8[4096]{0}', space=vmem, size = 0x1000, scoped, tag = 'input window, operand 0, single buffered']
    #allocation4 [shape = 's32[1]{0}', space=sflag, size = 0x4, scoped, tag = 'scoped memory for tpu_custom_call.1']
    #allocation5 [shape = 'u8[8192]{0}', space=vmem, size = 0x2000, scoped, tag = 'input window, operand 1, single buffered']
    #allocation6 [shape = 's32[1]{0}', space=sflag, size = 0x4, scoped, tag = 'scoped memory for tpu_custom_call.1']
    #allocation7 [shape = 'u8[16384]{0}', space=vmem, size = 0x4000, scoped, tag = 'input window, operand 3, single buffered']
    %13 = vsyncpa [#allocation4], 0
    %14 = vsyncpa [#allocation6], 0
    // Predicated region
    $region2: #{tpu_custom_call.1} parent=1 // pred_check
      _
    $region3: #{tpu_custom_call.1} parent=1 // pred_check_branch
      %16 = sbr.rel (0) target = $region5
    $region4: #{tpu_custom_call.1} parent=1 // pred_region
      %s18 = ssub.s32 128, 128
      %19 = vsyncadd [#allocation4], %s18
      %s21 = sshll.u32 [#allocation3], 4
      %s22 = int_to_ptr.vmem [resolvable:$true] %s21
      %24 = dma.hbm_to_vmem [thread:$0]  %s0, 128, %s22, [#allocation4]
    $region5: #{tpu_custom_call.1} parent=1 // pred_fallthru
      _
    // Predicated region
    $region6: #{tpu_custom_call.1} parent=1 // pred_check
      _
    $region7: #{tpu_custom_call.1} parent=1 // pred_check_branch
      %26 = sbr.rel (0) target = $region9
    $region8: #{tpu_custom_call.1} parent=1 // pred_region
      %s28 = ssub.s32 256, 256
      %29 = vsyncadd [#allocation6], %s28
      %s30 = sshll.u32 [#allocation5], 4
      %s31 = int_to_ptr.vmem [resolvable:$true] %s30
      %36 = dma.hbm_to_vmem [thread:$0]  %s1, 256, %s31, [#allocation6], 128, 128, 8
    $region9: #{tpu_custom_call.1} parent=1 // pred_fallthru
      _
    // Predicated region
    $region10: #{tpu_custom_call.1} parent=1 // pred_check
      _
    $region11: #{tpu_custom_call.1} parent=1 // pred_check_branch
      %38 = sbr.rel (0) target = $region13
    $region12: #{tpu_custom_call.1} parent=1 // pred_region
      _
    $region13: #{tpu_custom_call.1} parent=1 // pred_fallthru
      _
    // Predicated region
    $region14: #{tpu_custom_call.1} parent=1 // pred_check
      _
    $region15: #{tpu_custom_call.1} parent=1 // pred_check_branch
      %40 = sbr.rel (0) target = $region17
    $region16: #{tpu_custom_call.1} parent=1 // pred_region
      %s42 = ssub.s32 512, 512
      %43 = vsyncadd [#allocation6], %s42
      %s44 = sshll.u32 [#allocation7], 4
      %s45 = int_to_ptr.vmem [resolvable:$true] %s44
      %50 = dma.hbm_to_vmem [thread:$0]  %s3, 512, %s45, [#allocation6], 128, 128, 8
    $region17: #{tpu_custom_call.1} parent=1 // pred_fallthru
      _
    // Predicated region
    $region18: #{tpu_custom_call.1} parent=1 // pred_check
      _
    $region19: #{tpu_custom_call.1} parent=1 // pred_check_branch
      %52 = sbr.rel (0) target = $region21
    $region20: #{tpu_custom_call.1} parent=1 // pred_region
      _
    $region21: #{tpu_custom_call.1} parent=1 // pred_fallthru
      _
    // Predicated region
    $region22: #{tpu_custom_call.1} parent=1 // pred_check
      _
    $region23: #{tpu_custom_call.1} parent=1 // pred_check_branch
      %54 = sbr.rel (0) target = $region25
    $region24: #{tpu_custom_call.1} parent=1 // pred_region
      _
    $region25: #{tpu_custom_call.1} parent=1 // pred_fallthru
      _
    // Predicated region
    $region26: #{tpu_custom_call.1} parent=1 // pred_check
      _
    $region27: #{tpu_custom_call.1} parent=1 // pred_check_branch
      %56 = sbr.rel (0) target = $region29
    $region28: #{tpu_custom_call.1} parent=1 // pred_region
      _
    $region29: #{tpu_custom_call.1} parent=1 // pred_fallthru
      _
    // Predicated region
    $region30: #{tpu_custom_call.1} parent=1 // pred_check
      _
    $region31: #{tpu_custom_call.1} parent=1 // pred_check_branch
      %58 = sbr.rel (0) target = $region33
    $region32: #{tpu_custom_call.1} parent=1 // pred_region
      %59 = dma.done [#allocation4], 128
    $region33: #{tpu_custom_call.1} parent=1 // pred_fallthru
      _
    // Predicated region
    $region34: #{tpu_custom_call.1} parent=1 // pred_check
      _
    $region35: #{tpu_custom_call.1} parent=1 // pred_check_branch
      %61 = sbr.rel (0) target = $region37
    $region36: #{tpu_custom_call.1} parent=1 // pred_region
      %62 = dma.done [#allocation6], 256
    $region37: #{tpu_custom_call.1} parent=1 // pred_fallthru
      _
    // Predicated region
    $region38: #{tpu_custom_call.1} parent=1 // pred_check
      _
    $region39: #{tpu_custom_call.1} parent=1 // pred_check_branch
      %64 = sbr.rel (0) target = $region41
    $region40: #{tpu_custom_call.1} parent=1 // pred_region
      %65 = dma.done [#allocation6], 512
    $region41: #{tpu_custom_call.1} parent=1 // pred_fallthru
      _
    %v66 = vld [vmem:[#allocation3] sm:$0xff]
    %v67 = vld [vmem:[#allocation5] sm:$0xff]
    %v68 = vld [vmem:[#allocation5 + $0x8] sm:$0xff]
    %v69 = vld [vmem:[%s2] sm:$0x1]
    %v71 = vlaneseq
    %v72 = vshrl.u32 %v71, 7
    %v73 = vsub.s32 0, %v72
    %v74 = vrot.slane %v69, %v73
    %vm76 = vcmask 130048
    %v78 = vsel %vm76, %v66, 0
    %80 = vmatprep.subr.mxu0 0.0
    %81 = vmatpush1.msra.mxu0 %v67
    %82 = vmatprep.subr.mxu0 0.0
    %83 = vmatpush1.msra.mxu0 %v68
    %84 = vmatprep.subr.mxu0 0.0
    %85 = vmatpush1.msra.mxu0 0.0
    %86 = vmatprep.subr.mxu0 0.0
    %87 = vmatpush1.msra.mxu0 0.0
    %88 = vmatprep.subr.mxu0 0.0
    %89 = vmatpush1.msra.mxu0 0.0
    %90 = vmatprep.subr.mxu0 0.0
    %91 = vmatpush1.msra.mxu0 0.0
    %92 = vmatprep.subr.mxu0 0.0
    %93 = vmatpush1.msra.mxu0 0.0
    %94 = vmatprep.subr.mxu0 0.0
    %95 = vmatpush1.msra.mxu0 0.0
    %96 = vmatprep.subr.mxu0 0.0
    %97 = vmatpush1.msra.mxu0 0.0
    %98 = vmatprep.subr.mxu0 0.0
    %99 = vmatpush1.msra.mxu0 0.0
    %100 = vmatprep.subr.mxu0 0.0
    %101 = vmatpush1.msra.mxu0 0.0
    %102 = vmatprep.subr.mxu0 0.0
    %103 = vmatpush1.msra.mxu0 0.0
    %104 = vmatprep.subr.mxu0 0.0
    %105 = vmatpush1.msra.mxu0 0.0
    %106 = vmatprep.subr.mxu0 0.0
    %107 = vmatpush1.msra.mxu0 0.0
    %108 = vmatprep.subr.mxu0 0.0
    %109 = vmatpush1.msra.mxu0 0.0
    %110 = vmatprep.subr.mxu0 0.0
    %111 = vmatpush1.msra.mxu0 0.0
    %112 = vmatprep.subr.mxu0 0.0
    %113 = vmatpush1.msra.mxu0 0.0
    %114 = vmatprep.subr.mxu0 0.0
    %115 = vmatpush1.msra.mxu0 0.0
    %116 = vmatprep.subr.mxu0 0.0
    %117 = vmatpush1.msra.mxu0 0.0
    %118 = vmatprep.subr.mxu0 0.0
    %119 = vmatpush1.msra.mxu0 0.0
    %120 = vmatprep.subr.mxu0 0.0
    %121 = vmatpush1.msra.mxu0 0.0
    %122 = vmatprep.subr.mxu0 0.0
    %123 = vmatpush1.msra.mxu0 0.0
    %124 = vmatprep.subr.mxu0 0.0
    %125 = vmatpush1.msra.mxu0 0.0
    %126 = vmatprep.subr.mxu0 0.0
    %127 = vmatpush1.msra.mxu0 0.0
    %128 = vmatprep.subr.mxu0 0.0
    %129 = vmatpush1.msra.mxu0 0.0
    %130 = vmatprep.subr.mxu0 0.0
    %131 = vmatpush1.msra.mxu0 0.0
    %132 = vmatprep.subr.mxu0 0.0
    %133 = vmatpush1.msra.mxu0 0.0
    %134 = vmatprep.subr.mxu0 0.0
    %135 = vmatpush1.msra.mxu0 0.0
    %136 = vmatprep.subr.mxu0 0.0
    %137 = vmatpush1.msra.mxu0 0.0
    %138 = vmatprep.subr.mxu0 0.0
    %139 = vmatpush1.msra.mxu0 0.0
    %140 = vmatprep.subr.mxu0 0.0
    %141 = vmatpush1.msra.mxu0 0.0
    %142 = vmatprep.subr.mxu0 0.0
    %143 = vmatpush1.msra.mxu0 0.0
    %144 = vmatprep.mubr.f32.mxu0 0.0
    %145 = vmatmul.mubr.f32.gmra.mrb[0].mxu0 %v78
    %v146 = vpop.f32.mrb[0].mxu0
    %v147 = vadd.f32 %v74, %v146
    %v148 = vpop.f32.mrb[0].mxu0
    %149 = vdwg.mxu0
    %v150 = vmax.f32 %v147, 0.0
    %v151 = vld [vmem:[#allocation7] sm:$0xff]
    %v152 = vld [vmem:[#allocation7 + $0x8] sm:$0xff]
    %v153 = vld [vmem:[#allocation7 + $0x10] sm:$0xff]
    %v154 = vld [vmem:[#allocation7 + $0x18] sm:$0xff]
    %v155 = vld [vmem:[%s4] sm:$0x1]
    %v157 = vlaneseq
    %v158 = vshrl.u32 %v157, 7
    %v159 = vsub.s32 0, %v158
    %v160 = vrot.slane %v155, %v159
    %vm162 = vcmask 261120
    %v164 = vsel %vm162, %v150, 0
    %166 = vmatprep.subr.mxu0 0.0
    %167 = vmatpush1.msra.mxu0 %v151
    %168 = vmatprep.subr.mxu0 0.0
    %169 = vmatpush1.msra.mxu0 %v152
    %170 = vmatprep.subr.mxu0 0.0
    %171 = vmatpush1.msra.mxu0 %v153
    %172 = vmatprep.subr.mxu0 0.0
    %173 = vmatpush1.msra.mxu0 %v154
    %174 = vmatprep.subr.mxu0 0.0
    %175 = vmatpush1.msra.mxu0 0.0
    %176 = vmatprep.subr.mxu0 0.0
    %177 = vmatpush1.msra.mxu0 0.0
    %178 = vmatprep.subr.mxu0 0.0
    %179 = vmatpush1.msra.mxu0 0.0
    %180 = vmatprep.subr.mxu0 0.0
    %181 = vmatpush1.msra.mxu0 0.0
    %182 = vmatprep.subr.mxu0 0.0
    %183 = vmatpush1.msra.mxu0 0.0
    %184 = vmatprep.subr.mxu0 0.0
    %185 = vmatpush1.msra.mxu0 0.0
    %186 = vmatprep.subr.mxu0 0.0
    %187 = vmatpush1.msra.mxu0 0.0
    %188 = vmatprep.subr.mxu0 0.0
    %189 = vmatpush1.msra.mxu0 0.0
    %190 = vmatprep.subr.mxu0 0.0
    %191 = vmatpush1.msra.mxu0 0.0
    %192 = vmatprep.subr.mxu0 0.0
    %193 = vmatpush1.msra.mxu0 0.0
    %194 = vmatprep.subr.mxu0 0.0
    %195 = vmatpush1.msra.mxu0 0.0
    %196 = vmatprep.subr.mxu0 0.0
    %197 = vmatpush1.msra.mxu0 0.0
    %198 = vmatprep.subr.mxu0 0.0
    %199 = vmatpush1.msra.mxu0 0.0
    %200 = vmatprep.subr.mxu0 0.0
    %201 = vmatpush1.msra.mxu0 0.0
    %202 = vmatprep.subr.mxu0 0.0
    %203 = vmatpush1.msra.mxu0 0.0
    %204 = vmatprep.subr.mxu0 0.0
    %205 = vmatpush1.msra.mxu0 0.0
    %206 = vmatprep.subr.mxu0 0.0
    %207 = vmatpush1.msra.mxu0 0.0
    %208 = vmatprep.subr.mxu0 0.0
    %209 = vmatpush1.msra.mxu0 0.0
    %210 = vmatprep.subr.mxu0 0.0
    %211 = vmatpush1.msra.mxu0 0.0
    %212 = vmatprep.subr.mxu0 0.0
    %213 = vmatpush1.msra.mxu0 0.0
    %214 = vmatprep.subr.mxu0 0.0
    %215 = vmatpush1.msra.mxu0 0.0
    %216 = vmatprep.subr.mxu0 0.0
    %217 = vmatpush1.msra.mxu0 0.0
    %218 = vmatprep.subr.mxu0 0.0
    %219 = vmatpush1.msra.mxu0 0.0
    %220 = vmatprep.subr.mxu0 0.0
    %221 = vmatpush1.msra.mxu0 0.0
    %222 = vmatprep.subr.mxu0 0.0
    %223 = vmatpush1.msra.mxu0 0.0
    %224 = vmatprep.subr.mxu0 0.0
    %225 = vmatpush1.msra.mxu0 0.0
    %226 = vmatprep.subr.mxu0 0.0
    %227 = vmatpush1.msra.mxu0 0.0
    %228 = vmatprep.subr.mxu0 0.0
    %229 = vmatpush1.msra.mxu0 0.0
    %230 = vmatprep.mubr.f32.mxu0 0.0
    %231 = vmatmul.mubr.f32.gmra.mrb[0].mxu0 %v164
    %v232 = vpop.f32.mrb[0].mxu0
    %v233 = vadd.f32 %v160, %v232
    %v234 = vpop.f32.mrb[0].mxu0
    %235 = vdwg.mxu0
    %v236 = vmax.f32 %v233, 0.0
    %v237 = vld [vmem:[%s5] sm:$0x1]
    %v239 = vlaneseq
    %v240 = vshrl.u32 %v239, 7
    %v241 = vsub.s32 0, %v240
    %v242 = vrot.slane %v237, %v241
    %v244 = vmul.f32 %v236, %v242
    %v245 = vsel %vm162, %v244, 0.0
    %246 = vadd.xlane.f32.xlu0 %v245
    %v247 = vpop.xlane.xlu0 %246
    %s248 = sld [smem:[#allocation2]]
    %v249 = vstv %s248
    %v250 = vadd.f32 %v247, %v249
    %vm251 = vcmask 7168
    %252 = vst.msk [vmem:[%s7] sm:$0xff] %vm251, %v250
    // Predicated region
    $region42: #{tpu_custom_call.1} parent=1 // pred_check
      _
    $region43: #{tpu_custom_call.1} parent=1 // pred_check_branch
      %254 = sbr.rel (0) target = $region45
    $region44: #{tpu_custom_call.1} parent=1 // pred_region
      _
    $region45: #{tpu_custom_call.1} parent=1 // pred_fallthru
      _
    // Predicated region
    $region46: #{tpu_custom_call.1} parent=1 // pred_check
      _
    $region47: #{tpu_custom_call.1} parent=1 // pred_check_branch
      %256 = sbr.rel (0) target = $region49
    $region48: #{tpu_custom_call.1} parent=1 // pred_region
      _
    $region49: #{tpu_custom_call.1} parent=1 // pred_fallthru
      _
    %257 = vsyncpa [#allocation4], 1
    %258 = vsyncpa [#allocation6], 1

// kernel: tpu_custom_call.1
$region0: #{tpu_custom_call.1}
  #allocation0 [shape = 'u32[]', space=smem, size = 0x4, offset = 0x4, fixed_abs, tag = 'smem constant byte address 0x4 - core index']
  #allocation1 [shape = 'u32[144,128]{1,0:T(1,128)}', space=vmem, size = 0x12000, scoped, tag = 'internal scratch']
  #allocation2 [shape = 'f32[1,1]{1,0:T(1,128)S(6)}', space=smem, size = 0x200, scoped, tag = 'scoped memory for tpu_custom_call.1']
  %s0 = inlined_call_operand.hbm [shape: f32[8,16], index: 0, kind: input, shape index: {}]
  %s1 = inlined_call_operand.hbm [shape: f32[16,32], index: 1, kind: input, shape index: {}]
  %s2 = inlined_call_operand.vmem [shape: f32[1,32], index: 2, kind: input, shape index: {}]
  %s3 = inlined_call_operand.hbm [shape: f32[32,32], index: 3, kind: input, shape index: {}]
  %s4 = inlined_call_operand.vmem [shape: f32[1,32], index: 4, kind: input, shape index: {}]
  %s5 = inlined_call_operand.vmem [shape: f32[1,32], index: 5, kind: input, shape index: {}]
  %s6 = inlined_call_operand.<no memory space> [shape: f32[1,1], index: 6, kind: input, shape index: {}]
  %s7 = inlined_call_operand.vmem [shape: f32[8,1], index: 7, kind: output, shape index: {}]
  %s8 = sld [smem:[#allocation0]]
  $region50: #{tpu_custom_call.1} parent=0
    _
  %s10 = ssub.s32 1, %s8
  %s11 = scalar_select 0, %s10, %s8
  %12 = sst [smem:[#allocation2]] %s6
  $region1: #{tpu_custom_call.1} parent=0
    #allocation3 [shape = 'u8[4096]{0}', space=vmem, size = 0x1000, scoped, tag = 'input window, operand 0, single buffered']
    #allocation4 [shape = 's32[1]{0}', space=sflag, size = 0x4, scoped, tag = 'scoped memory for tpu_custom_call.1']
    #allocation5 [shape = 'u8[8192]{0}', space=vmem, size = 0x2000, scoped, tag = 'input window, operand 1, single buffered']
    #allocation6 [shape = 's32[1]{0}', space=sflag, size = 0x4, scoped, tag = 'scoped memory for tpu_custom_call.1']
    #allocation7 [shape = 'u8[16384]{0}', space=vmem, size = 0x4000, scoped, tag = 'input window, operand 3, single buffered']
    %13 = vsyncpa [#allocation4], 0
    %14 = vsyncpa [#allocation6], 0
    // Predicated region
    $region2: #{tpu_custom_call.1} parent=1 // pred_check
      _
    $region3: #{tpu_custom_call.1} parent=1 // pred_check_branch
      %16 = sbr.rel (0) target = $region5
    $region4: #{tpu_custom_call.1} parent=1 // pred_region
      %s18 = ssub.s32 128, 128
      %19 = vsyncadd [#allocation4], %s18
      %s21 = sshll.u32 [#allocation3], 4
      %s22 = int_to_ptr.vmem [resolvable:$true] %s21
      %24 = dma.hbm_to_vmem [thread:$0]  %s0, 128, %s22, [#allocation4]
    $region5: #{tpu_custom_call.1} parent=1 // pred_fallthru
      _
    // Predicated region
    $region6: #{tpu_custom_call.1} parent=1 // pred_check
      _
    $region7: #{tpu_custom_call.1} parent=1 // pred_check_branch
      %26 = sbr.rel (0) target = $region9
    $region8: #{tpu_custom_call.1} parent=1 // pred_region
      %s28 = ssub.s32 256, 256
      %29 = vsyncadd [#allocation6], %s28
      %s30 = sshll.u32 [#allocation5], 4
      %s31 = int_to_ptr.vmem [resolvable:$true] %s30
      %36 = dma.hbm_to_vmem [thread:$0]  %s1, 256, %s31, [#allocation6], 128, 128, 8
    $region9: #{tpu_custom_call.1} parent=1 // pred_fallthru
      _
    // Predicated region
    $region10: #{tpu_custom_call.1} parent=1 // pred_check
      _
    $region11: #{tpu_custom_call.1} parent=1 // pred_check_branch
      %38 = sbr.rel (0) target = $region13
    $region12: #{tpu_custom_call.1} parent=1 // pred_region
      _
    $region13: #{tpu_custom_call.1} parent=1 // pred_fallthru
      _
    // Predicated region
    $region14: #{tpu_custom_call.1} parent=1 // pred_check
      _
    $region15: #{tpu_custom_call.1} parent=1 // pred_check_branch
      %40 = sbr.rel (0) target = $region17
    $region16: #{tpu_custom_call.1} parent=1 // pred_region
      %s42 = ssub.s32 512, 512
      %43 = vsyncadd [#allocation6], %s42
      %s44 = sshll.u32 [#allocation7], 4
      %s45 = int_to_ptr.vmem [resolvable:$true] %s44
      %50 = dma.hbm_to_vmem [thread:$0]  %s3, 512, %s45, [#allocation6], 128, 128, 8
    $region17: #{tpu_custom_call.1} parent=1 // pred_fallthru
      _
    // Predicated region
    $region18: #{tpu_custom_call.1} parent=1 // pred_check
      _
    $region19: #{tpu_custom_call.1} parent=1 // pred_check_branch
      %52 = sbr.rel (0) target = $region21
    $region20: #{tpu_custom_call.1} parent=1 // pred_region
      _
    $region21: #{tpu_custom_call.1} parent=1 // pred_fallthru
      _
    // Predicated region
    $region22: #{tpu_custom_call.1} parent=1 // pred_check
      _
    $region23: #{tpu_custom_call.1} parent=1 // pred_check_branch
      %54 = sbr.rel (0) target = $region25
    $region24: #{tpu_custom_call.1} parent=1 // pred_region
      _
    $region25: #{tpu_custom_call.1} parent=1 // pred_fallthru
      _
    // Predicated region
    $region26: #{tpu_custom_call.1} parent=1 // pred_check
      _
    $region27: #{tpu_custom_call.1} parent=1 // pred_check_branch
      %56 = sbr.rel (0) target = $region29
    $region28: #{tpu_custom_call.1} parent=1 // pred_region
      _
    $region29: #{tpu_custom_call.1} parent=1 // pred_fallthru
      _
    // Predicated region
    $region30: #{tpu_custom_call.1} parent=1 // pred_check
      _
    $region31: #{tpu_custom_call.1} parent=1 // pred_check_branch
      %58 = sbr.rel (0) target = $region33
    $region32: #{tpu_custom_call.1} parent=1 // pred_region
      %59 = dma.done [#allocation4], 128
    $region33: #{tpu_custom_call.1} parent=1 // pred_fallthru
      _
    // Predicated region
    $region34: #{tpu_custom_call.1} parent=1 // pred_check
      _
    $region35: #{tpu_custom_call.1} parent=1 // pred_check_branch
      %61 = sbr.rel (0) target = $region37
    $region36: #{tpu_custom_call.1} parent=1 // pred_region
      %62 = dma.done [#allocation6], 256
    $region37: #{tpu_custom_call.1} parent=1 // pred_fallthru
      _
    // Predicated region
    $region38: #{tpu_custom_call.1} parent=1 // pred_check
      _
    $region39: #{tpu_custom_call.1} parent=1 // pred_check_branch
      %64 = sbr.rel (0) target = $region41
    $region40: #{tpu_custom_call.1} parent=1 // pred_region
      %65 = dma.done [#allocation6], 512
    $region41: #{tpu_custom_call.1} parent=1 // pred_fallthru
      _
    %v66 = vld [vmem:[#allocation3] sm:$0xff]
    %v67 = vld [vmem:[#allocation5] sm:$0xff]
    %v68 = vld [vmem:[#allocation5 + $0x8] sm:$0xff]
    %v69 = vld [vmem:[%s2] sm:$0x1]
    %v71 = vlaneseq
    %v72 = vshrl.u32 %v71, 7
    %v73 = vsub.s32 0, %v72
    %v74 = vrot.slane %v69, %v73
    %vm76 = vcmask 130048
    %v78 = vsel %vm76, %v66, 0
    %80 = vmatprep.subr.mxu0 0.0
    %81 = vmatpush1.msra.mxu0 %v67
    %82 = vmatprep.subr.mxu0 0.0
    %83 = vmatpush1.msra.mxu0 %v68
    %84 = vmatprep.subr.mxu0 0.0
    %85 = vmatpush1.msra.mxu0 0.0
    %86 = vmatprep.subr.mxu0 0.0
    %87 = vmatpush1.msra.mxu0 0.0
    %88 = vmatprep.subr.mxu0 0.0
    %89 = vmatpush1.msra.mxu0 0.0
    %90 = vmatprep.subr.mxu0 0.0
    %91 = vmatpush1.msra.mxu0 0.0
    %92 = vmatprep.subr.mxu0 0.0
    %93 = vmatpush1.msra.mxu0 0.0
    %94 = vmatprep.subr.mxu0 0.0
    %95 = vmatpush1.msra.mxu0 0.0
    %96 = vmatprep.subr.mxu0 0.0
    %97 = vmatpush1.msra.mxu0 0.0
    %98 = vmatprep.subr.mxu0 0.0
    %99 = vmatpush1.msra.mxu0 0.0
    %100 = vmatprep.subr.mxu0 0.0
    %101 = vmatpush1.msra.mxu0 0.0
    %102 = vmatprep.subr.mxu0 0.0
    %103 = vmatpush1.msra.mxu0 0.0
    %104 = vmatprep.subr.mxu0 0.0
    %105 = vmatpush1.msra.mxu0 0.0
    %106 = vmatprep.subr.mxu0 0.0
    %107 = vmatpush1.msra.mxu0 0.0
    %108 = vmatprep.subr.mxu0 0.0
    %109 = vmatpush1.msra.mxu0 0.0
    %110 = vmatprep.subr.mxu0 0.0
    %111 = vmatpush1.msra.mxu0 0.0
    %112 = vmatprep.subr.mxu0 0.0
    %113 = vmatpush1.msra.mxu0 0.0
    %114 = vmatprep.subr.mxu0 0.0
    %115 = vmatpush1.msra.mxu0 0.0
    %116 = vmatprep.subr.mxu0 0.0
    %117 = vmatpush1.msra.mxu0 0.0
    %118 = vmatprep.subr.mxu0 0.0
    %119 = vmatpush1.msra.mxu0 0.0
    %120 = vmatprep.subr.mxu0 0.0
    %121 = vmatpush1.msra.mxu0 0.0
    %122 = vmatprep.subr.mxu0 0.0
    %123 = vmatpush1.msra.mxu0 0.0
    %124 = vmatprep.subr.mxu0 0.0
    %125 = vmatpush1.msra.mxu0 0.0
    %126 = vmatprep.subr.mxu0 0.0
    %127 = vmatpush1.msra.mxu0 0.0
    %128 = vmatprep.subr.mxu0 0.0
    %129 = vmatpush1.msra.mxu0 0.0
    %130 = vmatprep.subr.mxu0 0.0
    %131 = vmatpush1.msra.mxu0 0.0
    %132 = vmatprep.subr.mxu0 0.0
    %133 = vmatpush1.msra.mxu0 0.0
    %134 = vmatprep.subr.mxu0 0.0
    %135 = vmatpush1.msra.mxu0 0.0
    %136 = vmatprep.subr.mxu0 0.0
    %137 = vmatpush1.msra.mxu0 0.0
    %138 = vmatprep.subr.mxu0 0.0
    %139 = vmatpush1.msra.mxu0 0.0
    %140 = vmatprep.subr.mxu0 0.0
    %141 = vmatpush1.msra.mxu0 0.0
    %142 = vmatprep.subr.mxu0 0.0
    %143 = vmatpush1.msra.mxu0 0.0
    %144 = vmatprep.mubr.f32.mxu0 0.0
    %145 = vmatmul.mubr.f32.gmra.mrb[0].mxu0 %v78
    %v146 = vpop.f32.mrb[0].mxu0
    %v147 = vadd.f32 %v74, %v146
    %v148 = vpop.f32.mrb[0].mxu0
    %149 = vdwg.mxu0
    %v150 = vmax.f32 %v147, 0.0
    %v151 = vld [vmem:[#allocation7] sm:$0xff]
    %v152 = vld [vmem:[#allocation7 + $0x8] sm:$0xff]
    %v153 = vld [vmem:[#allocation7 + $0x10] sm:$0xff]
    %v154 = vld [vmem:[#allocation7 + $0x18] sm:$0xff]
    %v155 = vld [vmem:[%s4] sm:$0x1]
    %v157 = vlaneseq
    %v158 = vshrl.u32 %v157, 7
    %v159 = vsub.s32 0, %v158
    %v160 = vrot.slane %v155, %v159
    %vm162 = vcmask 261120
    %v164 = vsel %vm162, %v150, 0
    %166 = vmatprep.subr.mxu0 0.0
    %167 = vmatpush1.msra.mxu0 %v151
    %168 = vmatprep.subr.mxu0 0.0
    %169 = vmatpush1.msra.mxu0 %v152
    %170 = vmatprep.subr.mxu0 0.0
    %171 = vmatpush1.msra.mxu0 %v153
    %172 = vmatprep.subr.mxu0 0.0
    %173 = vmatpush1.msra.mxu0 %v154
    %174 = vmatprep.subr.mxu0 0.0
    %175 = vmatpush1.msra.mxu0 0.0
    %176 = vmatprep.subr.mxu0 0.0
    %177 = vmatpush1.msra.mxu0 0.0
    %178 = vmatprep.subr.mxu0 0.0
    %179 = vmatpush1.msra.mxu0 0.0
    %180 = vmatprep.subr.mxu0 0.0
    %181 = vmatpush1.msra.mxu0 0.0
    %182 = vmatprep.subr.mxu0 0.0
    %183 = vmatpush1.msra.mxu0 0.0
    %184 = vmatprep.subr.mxu0 0.0
    %185 = vmatpush1.msra.mxu0 0.0
    %186 = vmatprep.subr.mxu0 0.0
    %187 = vmatpush1.msra.mxu0 0.0
    %188 = vmatprep.subr.mxu0 0.0
    %189 = vmatpush1.msra.mxu0 0.0
    %190 = vmatprep.subr.mxu0 0.0
    %191 = vmatpush1.msra.mxu0 0.0
    %192 = vmatprep.subr.mxu0 0.0
    %193 = vmatpush1.msra.mxu0 0.0
    %194 = vmatprep.subr.mxu0 0.0
    %195 = vmatpush1.msra.mxu0 0.0
    %196 = vmatprep.subr.mxu0 0.0
    %197 = vmatpush1.msra.mxu0 0.0
    %198 = vmatprep.subr.mxu0 0.0
    %199 = vmatpush1.msra.mxu0 0.0
    %200 = vmatprep.subr.mxu0 0.0
    %201 = vmatpush1.msra.mxu0 0.0
    %202 = vmatprep.subr.mxu0 0.0
    %203 = vmatpush1.msra.mxu0 0.0
    %204 = vmatprep.subr.mxu0 0.0
    %205 = vmatpush1.msra.mxu0 0.0
    %206 = vmatprep.subr.mxu0 0.0
    %207 = vmatpush1.msra.mxu0 0.0
    %208 = vmatprep.subr.mxu0 0.0
    %209 = vmatpush1.msra.mxu0 0.0
    %210 = vmatprep.subr.mxu0 0.0
    %211 = vmatpush1.msra.mxu0 0.0
    %212 = vmatprep.subr.mxu0 0.0
    %213 = vmatpush1.msra.mxu0 0.0
    %214 = vmatprep.subr.mxu0 0.0
    %215 = vmatpush1.msra.mxu0 0.0
    %216 = vmatprep.subr.mxu0 0.0
    %217 = vmatpush1.msra.mxu0 0.0
    %218 = vmatprep.subr.mxu0 0.0
    %219 = vmatpush1.msra.mxu0 0.0
    %220 = vmatprep.subr.mxu0 0.0
    %221 = vmatpush1.msra.mxu0 0.0
    %222 = vmatprep.subr.mxu0 0.0
    %223 = vmatpush1.msra.mxu0 0.0
    %224 = vmatprep.subr.mxu0 0.0
    %225 = vmatpush1.msra.mxu0 0.0
    %226 = vmatprep.subr.mxu0 0.0
    %227 = vmatpush1.msra.mxu0 0.0
    %228 = vmatprep.subr.mxu0 0.0
    %229 = vmatpush1.msra.mxu0 0.0
    %230 = vmatprep.mubr.f32.mxu0 0.0
    %231 = vmatmul.mubr.f32.gmra.mrb[0].mxu0 %v164
    %v232 = vpop.f32.mrb[0].mxu0
    %v233 = vadd.f32 %v160, %v232
    %v234 = vpop.f32.mrb[0].mxu0
    %235 = vdwg.mxu0
    %v236 = vmax.f32 %v233, 0.0
    %v237 = vld [vmem:[%s5] sm:$0x1]
    %v239 = vlaneseq
    %v240 = vshrl.u32 %v239, 7
    %v241 = vsub.s32 0, %v240
    %v242 = vrot.slane %v237, %v241
    %v244 = vmul.f32 %v236, %v242
    %v245 = vsel %vm162, %v244, 0.0
    %246 = vadd.xlane.f32.xlu0 %v245
    %v247 = vpop.xlane.xlu0 %246
    %s248 = sld [smem:[#allocation2]]
    %v249 = vstv %s248
    %v250 = vadd.f32 %v247, %v249
    %vm251 = vcmask 7168
    %252 = vst.msk [vmem:[%s7] sm:$0xff] %vm251, %v250
    // Predicated region
    $region42: #{tpu_custom_call.1} parent=1 // pred_check
      _
    $region43: #{tpu_custom_call.1} parent=1 // pred_check_branch
      %254 = sbr.rel (0) target = $region45
    $region44: #{tpu_custom_call.1} parent=1 // pred_region
      _
    $region45: #{tpu_custom_call.1} parent=1 // pred_fallthru
      _
    // Predicated region
    $region46: #{tpu_custom_call.1} parent=1 // pred_check
      _
    $region47: #{tpu_custom_call.1} parent=1 // pred_check_branch
      %256 = sbr.rel (0) target = $region49
    $region48: #{tpu_custom_call.1} parent=1 // pred_region
      _
    $region49: #{tpu_custom_call.1} parent=1 // pred_fallthru
      _
    %257 = vsyncpa [#allocation4], 1
    %258 = vsyncpa [#allocation6], 1

</llo_original>
